<compile_context>
chip_gen: v7x
topology: tpu7x:2x2x1
jax: 0.10.0
libtpu: 0.0.40
codegen_flags: <defaults>
</compile_context>

<pallas_src>
import functools

import jax
import jax.numpy as jnp
from jax.experimental import pallas as pl
from jax.experimental.pallas import tpu as pltpu


def _rotate_tree(v, width, op):
    """Per-lane running `op` over a contiguous window of `width` lanes via lane rotations."""
    cov = 1
    while cov < width:
        s = min(cov, width - cov)
        v = op(v, pltpu.roll(v, shift=s, axis=1))
        cov += s
    return v


def _raster_confidence_kernel(x_ref, wg_ref, gid_ref, b_ref, out_ref, *, w_width):
    inv_w = 1.0 / float(w_width)
    xf = x_ref[...].astype(jnp.float32)                      # [bt, F*W], lane-dense

    # --- per-W-group max via log2(W) roll + max steps (XLU) -----------------------------
    xm = _rotate_tree(xf, w_width, jnp.maximum)              # lane i: max over a W-lane window
    # Direction-agnostic selection of the one lane per group whose window is the whole
    # group: run the same rotation tree over group ids; a lane is "pure" iff the min and
    # max group id seen in its window agree.
    gid = gid_ref[...]                                       # [1, F*W] int32, value = f
    gmin = _rotate_tree(gid, w_width, jnp.minimum)
    gmax = _rotate_tree(gid, w_width, jnp.maximum)
    sel = gmin == gmax                                       # exactly one True lane per group

    # --- fused mean + max contribution, single dense lane reduction ---------------------
    #   sum_f w_f * (mean_j x[f,j] + max_j x[f,j])
    # = sum_{f,j} w_grp[f*W+j] * (x[f,j]/W + sel[f*W+j] * groupmax[f])
    contrib = xf * inv_w + jnp.where(sel, xm, 0.0)           # [bt, F*W]
    logit = jnp.sum(contrib * wg_ref[...], axis=-1, keepdims=True)   # [bt, 1] (VPU/XLU, no 1-wide MXU)
    logit = logit + b_ref[...]                               # bias broadcast from [1, 1]
    out_ref[...] = jax.nn.sigmoid(logit).astype(out_ref.dtype)


def _pick_batch_tile(batch, fw, itemsize):
    """Largest batch tile whose double-buffered, lane-padded activation fits ~24 MiB."""
    lane_padded = pl.cdiv(fw, 128) * 128                     # minor dim pads to 128 lanes in VMEM
    row_bytes = lane_padded * itemsize
    budget = 24 * 1024 * 1024                                # headroom under v7x's 32 MiB scoped VMEM
    cap = max(int(budget // (2 * row_bytes)), 8)
    cap = min(cap, 1024)
    if batch <= cap:
        return batch                                         # block == full batch dim is always legal
    return max(8, (cap // 8) * 8)                            # second-minor block dim must be %8


def raster_confidence_forward(x, w, b):
    """RasterConfidence.forward(x) -> [B, 1].

    x: [B, C, H, W]  activations (any float dtype; f32 accumulation in-kernel)
    w: [1, C*H]      Linear weight (PyTorch out_features x in_features layout)
    b: [1]           Linear bias
    """
    B = x.shape[0]
    W = x.shape[-1]
    F = 1
    for d in x.shape[1:-1]:
        F *= d
    FW = F * W

    # Free row-major reshape: lane index = (c*H + h)*W + w  (Flatten order, W minor).
    x2 = x.reshape(B, FW)
    w_flat = w.reshape(F).astype(jnp.float32)
    w_grp = jnp.repeat(w_flat, W).reshape(1, FW)             # w_grp[f*W + j] = w_f
    gid = jnp.repeat(jnp.arange(F, dtype=jnp.int32), W).reshape(1, FW)
    b2 = b.reshape(1, 1).astype(jnp.float32)

    bt = _pick_batch_tile(B, FW, x2.dtype.itemsize)
    grid = (pl.cdiv(B, bt),)
    resident = lambda shape: pl.BlockSpec(shape, lambda i, _s=shape: (0,) * len(_s))

    kernel = functools.partial(_raster_confidence_kernel, w_width=W)
    return pl.pallas_call(
        kernel,
        out_shape=jax.ShapeDtypeStruct((B, 1), jnp.float32),
        grid=grid,
        in_specs=[
            pl.BlockSpec((bt, FW), lambda i: (i, 0)),        # activations: tiled over batch, pipelined
            resident((1, FW)),                               # repeated weight row (VMEM-resident)
            resident((1, FW)),                               # group ids (VMEM-resident)
            resident((1, 1)),                                # bias
        ],
        out_specs=pl.BlockSpec((bt, 1), lambda i: (i, 0)),
        compiler_params=pltpu.CompilerParams(
            dimension_semantics=("parallel",),               # batch tiles -> both TCs on v7x
            vmem_limit_bytes=32 * 1024 * 1024,
        ),
    )(x2, w_grp, gid, b2)


def _reference(x, w, b):
    feat = jnp.mean(x, axis=-1) + jnp.max(x, axis=-1)        # [B, C, H]
    flat = feat.reshape(feat.shape[0], -1)                   # [B, C*H]
    return jax.nn.sigmoid(flat @ w.reshape(-1, 1).astype(flat.dtype) + b.reshape(1, 1))


if __name__ == "__main__":
    B, C, H, W = 2, 4, 16, 16
    fc_input = C * H

    key = jax.random.PRNGKey(0)
    kx, kw, kb = jax.random.split(key, 3)

    # Deterministic inputs / PyTorch-Linear-style uniform init.
    bound = 1.0 / jnp.sqrt(jnp.float32(fc_input))
    x = jax.random.normal(kx, (B, C, H, W), dtype=jnp.float32)
    w = jax.random.uniform(kw, (1, fc_input), minval=-bound, maxval=bound, dtype=jnp.float32)
    b = jax.random.uniform(kb, (1,), minval=-bound, maxval=bound, dtype=jnp.float32)

    out = raster_confidence_forward(x, w, b)
    out = jax.block_until_ready(out)

    ref = _reference(x, w, b)
    assert out.shape == (B, 1)
    assert jnp.allclose(out, ref, atol=1e-5, rtol=1e-5), "Pallas RasterConfidence mismatch vs reference"

    print("KERNEL_OK")
</pallas_src>

<mosaic_0001>
module attributes {stable_mosaic.version = 11 : i64} {
  func.func @_raster_confidence_kernel(%arg0: i32, %arg1: memref<2x1024xf32, #tpu.memory_space<vmem>>, %arg2: memref<1x1024xf32, #tpu.memory_space<vmem>>, %arg3: memref<1x1024xi32, #tpu.memory_space<vmem>>, %arg4: memref<1x1xf32, #tpu.memory_space<vmem>>, %arg5: memref<2x1xf32, #tpu.memory_space<vmem>>) attributes {dimension_semantics = [#tpu.dimension_semantics<parallel>], iteration_bounds = array<i64: 1>, scalar_prefetch = 0 : i64, scratch_operands = 0 : i64, tpu.core_type = #tpu.core_type<tc>, window_params = [{transform_indices = @transform_0, window_bounds = array<i64: 2, 1024>}, {pipeline_mode = #tpu.pipeline_mode<synchronous>, transform_indices = @transform_1, window_bounds = array<i64: 1, 1024>}, {pipeline_mode = #tpu.pipeline_mode<synchronous>, transform_indices = @transform_2, window_bounds = array<i64: 1, 1024>}, {pipeline_mode = #tpu.pipeline_mode<synchronous>, transform_indices = @transform_3, window_bounds = array<i64: 1, 1>}, {transform_indices = @transform_4, window_bounds = array<i64: 2, 1>}]} {
    %c0 = arith.constant 0 : index
    %c0_0 = arith.constant 0 : index
    %0 = vector.load %arg1[%c0, %c0_0] : memref<2x1024xf32, #tpu.memory_space<vmem>>, vector<2x1024xf32>
    %c1_i32 = arith.constant 1 : i32
    %1 = tpu.dynamic_rotate %0 by %c1_i32 dim 1 : vector<2x1024xf32>, i32 -> vector<2x1024xf32>
    %2 = arith.maximumf %0, %1 : vector<2x1024xf32>
    %c2_i32 = arith.constant 2 : i32
    %3 = tpu.dynamic_rotate %2 by %c2_i32 dim 1 : vector<2x1024xf32>, i32 -> vector<2x1024xf32>
    %4 = arith.maximumf %2, %3 : vector<2x1024xf32>
    %c4_i32 = arith.constant 4 : i32
    %5 = tpu.dynamic_rotate %4 by %c4_i32 dim 1 : vector<2x1024xf32>, i32 -> vector<2x1024xf32>
    %6 = arith.maximumf %4, %5 : vector<2x1024xf32>
    %c8_i32 = arith.constant 8 : i32
    %7 = tpu.dynamic_rotate %6 by %c8_i32 dim 1 : vector<2x1024xf32>, i32 -> vector<2x1024xf32>
    %8 = arith.maximumf %6, %7 : vector<2x1024xf32>
    %c0_1 = arith.constant 0 : index
    %c0_2 = arith.constant 0 : index
    %9 = vector.load %arg3[%c0_1, %c0_2] : memref<1x1024xi32, #tpu.memory_space<vmem>>, vector<1x1024xi32>
    %c1_i32_3 = arith.constant 1 : i32
    %10 = tpu.dynamic_rotate %9 by %c1_i32_3 dim 1 : vector<1x1024xi32>, i32 -> vector<1x1024xi32>
    %11 = arith.minsi %9, %10 : vector<1x1024xi32>
    %c2_i32_4 = arith.constant 2 : i32
    %12 = tpu.dynamic_rotate %11 by %c2_i32_4 dim 1 : vector<1x1024xi32>, i32 -> vector<1x1024xi32>
    %13 = arith.minsi %11, %12 : vector<1x1024xi32>
    %c4_i32_5 = arith.constant 4 : i32
    %14 = tpu.dynamic_rotate %13 by %c4_i32_5 dim 1 : vector<1x1024xi32>, i32 -> vector<1x1024xi32>
    %15 = arith.minsi %13, %14 : vector<1x1024xi32>
    %c8_i32_6 = arith.constant 8 : i32
    %16 = tpu.dynamic_rotate %15 by %c8_i32_6 dim 1 : vector<1x1024xi32>, i32 -> vector<1x1024xi32>
    %17 = arith.minsi %15, %16 : vector<1x1024xi32>
    %c1_i32_7 = arith.constant 1 : i32
    %18 = tpu.dynamic_rotate %9 by %c1_i32_7 dim 1 : vector<1x1024xi32>, i32 -> vector<1x1024xi32>
    %19 = arith.maxsi %9, %18 : vector<1x1024xi32>
    %c2_i32_8 = arith.constant 2 : i32
    %20 = tpu.dynamic_rotate %19 by %c2_i32_8 dim 1 : vector<1x1024xi32>, i32 -> vector<1x1024xi32>
    %21 = arith.maxsi %19, %20 : vector<1x1024xi32>
    %c4_i32_9 = arith.constant 4 : i32
    %22 = tpu.dynamic_rotate %21 by %c4_i32_9 dim 1 : vector<1x1024xi32>, i32 -> vector<1x1024xi32>
    %23 = arith.maxsi %21, %22 : vector<1x1024xi32>
    %c8_i32_10 = arith.constant 8 : i32
    %24 = tpu.dynamic_rotate %23 by %c8_i32_10 dim 1 : vector<1x1024xi32>, i32 -> vector<1x1024xi32>
    %25 = arith.maxsi %23, %24 : vector<1x1024xi32>
    %26 = arith.cmpi eq, %17, %25 : vector<1x1024xi32>
    %cst = arith.constant 6.250000e-02 : f32
    %27 = vector.broadcast %cst : f32 to vector<2x1024xf32>
    %28 = arith.mulf %0, %27 : vector<2x1024xf32>
    %cst_11 = arith.constant 0.000000e+00 : f32
    %29 = vector.shape_cast %26 : vector<1x1024xi1> to vector<1x1024xi1>
    %30 = vector.broadcast %29 : vector<1x1024xi1> to vector<2x1024xi1>
    %31 = vector.broadcast %cst_11 : f32 to vector<2x1024xf32>
    %32 = arith.select %30, %8, %31 : vector<2x1024xi1>, vector<2x1024xf32>
    %33 = arith.addf %28, %32 : vector<2x1024xf32>
    %c0_12 = arith.constant 0 : index
    %c0_13 = arith.constant 0 : index
    %34 = vector.load %arg2[%c0_12, %c0_13] : memref<1x1024xf32, #tpu.memory_space<vmem>>, vector<1x1024xf32>
    %35 = vector.broadcast %34 : vector<1x1024xf32> to vector<2x1024xf32>
    %36 = arith.mulf %33, %35 : vector<2x1024xf32>
    %cst_14 = arith.constant dense<0.000000e+00> : vector<2xf32>
    %37 = vector.multi_reduction <add>, %36, %cst_14 [1] : vector<2x1024xf32> to vector<2xf32>
    %38 = vector.shape_cast %37 : vector<2xf32> to vector<2x1xf32>
    %c0_15 = arith.constant 0 : index
    %c0_16 = arith.constant 0 : index
    %39 = vector.load %arg4[%c0_15, %c0_16] : memref<1x1xf32, #tpu.memory_space<vmem>>, vector<1x1xf32>
    %40 = vector.broadcast %39 : vector<1x1xf32> to vector<2x1xf32>
    %41 = arith.addf %38, %40 : vector<2x1xf32>
    %42 = arith.negf %41 : vector<2x1xf32>
    %43 = math.exp %42 : vector<2x1xf32>
    %cst_17 = arith.constant 1.000000e+00 : f32
    %44 = vector.broadcast %cst_17 : f32 to vector<2x1xf32>
    %45 = arith.addf %44, %43 : vector<2x1xf32>
    %46 = arith.divf %44, %45 : vector<2x1xf32>
    %c0_18 = arith.constant 0 : index
    %c0_19 = arith.constant 0 : index
    %47 = vector.load %arg5[%c0_18, %c0_19] : memref<2x1xf32, #tpu.memory_space<vmem>>, vector<2x1xf32>
    tpu.vector_store %arg5[%c0_18, %c0_19], %46 {strides = array<i32>} : memref<2x1xf32, #tpu.memory_space<vmem>>, vector<2x1xf32>,
    return
  }
  func.func @transform_0(%arg0: i32) -> (i32, i32) {
    %c0_i32 = arith.constant 0 : i32
    %c0_i32_0 = arith.constant 0 : i32
    return %arg0, %c0_i32 : i32, i32
  }
  func.func @transform_1(%arg0: i32) -> (i32, i32) {
    %c0_i32 = arith.constant 0 : i32
    %c0_i32_0 = arith.constant 0 : i32
    %c0_i32_1 = arith.constant 0 : i32
    return %c0_i32, %c0_i32_0 : i32, i32
  }
  func.func @transform_2(%arg0: i32) -> (i32, i32) {
    %c0_i32 = arith.constant 0 : i32
    %c0_i32_0 = arith.constant 0 : i32
    %c0_i32_1 = arith.constant 0 : i32
    return %c0_i32, %c0_i32_0 : i32, i32
  }
  func.func @transform_3(%arg0: i32) -> (i32, i32) {
    %c0_i32 = arith.constant 0 : i32
    %c0_i32_0 = arith.constant 0 : i32
    %c0_i32_1 = arith.constant 0 : i32
    return %c0_i32, %c0_i32_0 : i32, i32
  }
  func.func @transform_4(%arg0: i32) -> (i32, i32) {
    %c0_i32 = arith.constant 0 : i32
    %c0_i32_0 = arith.constant 0 : i32
    return %arg0, %c0_i32 : i32, i32
  }
}

</mosaic_0001>

<llo_original>
// kernel: tpu_custom_call.1
$region0: #{tpu_custom_call.1}
  #allocation0 [shape = 'u32[]', space=smem, size = 0x4, offset = 0x4, fixed_abs, tag = 'smem constant byte address 0x4 - core index']
  #allocation1 [shape = 'u32[144,128]{1,0:T(1,128)}', space=vmem, size = 0x12000, scoped, tag = 'internal scratch']
  #allocation2 [shape = 'f32[1,1]{1,0:T(1,128)S(1)}', space=vmem, size = 0x200, scoped, tag = 'scoped memory for tpu_custom_call.1']
  %s0 = inlined_call_operand.hbm [shape: f32[2,1024], index: 0, kind: input, shape index: {}]
  %s1 = inlined_call_operand.hbm [shape: f32[1,1024], index: 1, kind: input, shape index: {}]
  %s2 = inlined_call_operand.vmem [shape: s32[1,1024], index: 2, kind: input, shape index: {}]
  %s3 = inlined_call_operand.<no memory space> [shape: f32[1,1], index: 3, kind: input, shape index: {}]
  %s4 = inlined_call_operand.vmem [shape: f32[2,1], index: 4, kind: output, shape index: {}]
  %s5 = sld [smem:[#allocation0]]
  $region34: #{tpu_custom_call.1} parent=0
    _
  %s7 = ssub.s32 1, %s5
  %s8 = scalar_select 0, %s7, %s5
  %v9 = vstv %s3
  %10 = vst [vmem:[#allocation2] sm:$0x1] %v9
  $region1: #{tpu_custom_call.1} parent=0
    #allocation3 [shape = 'u8[8192]{0}', space=vmem, size = 0x2000, scoped, tag = 'input window, operand 0, single buffered']
    #allocation4 [shape = 's32[1]{0}', space=sflag, size = 0x4, scoped, tag = 'scoped memory for tpu_custom_call.1']
    #allocation5 [shape = 'u8[4096]{0}', space=vmem, size = 0x1000, scoped, tag = 'input window, operand 1, single buffered']
    #allocation6 [shape = 's32[1]{0}', space=sflag, size = 0x4, scoped, tag = 'scoped memory for tpu_custom_call.1']
    %11 = vsyncpa [#allocation4], 0
    %12 = vsyncpa [#allocation6], 0
    // Predicated region
    $region2: #{tpu_custom_call.1} parent=1 // pred_check
      _
    $region3: #{tpu_custom_call.1} parent=1 // pred_check_branch
      %14 = sbr.rel (0) target = $region5
    $region4: #{tpu_custom_call.1} parent=1 // pred_region
      %s16 = ssub.s32 256, 256
      %17 = vsyncadd [#allocation4], %s16
      %s19 = sshll.u32 [#allocation3], 4
      %s20 = int_to_ptr.vmem [resolvable:$true] %s19
      %22 = dma.hbm_to_vmem [thread:$0]  %s0, 256, %s20, [#allocation4]
    $region5: #{tpu_custom_call.1} parent=1 // pred_fallthru
      _
    // Predicated region
    $region6: #{tpu_custom_call.1} parent=1 // pred_check
      _
    $region7: #{tpu_custom_call.1} parent=1 // pred_check_branch
      %24 = sbr.rel (0) target = $region9
    $region8: #{tpu_custom_call.1} parent=1 // pred_region
      %s26 = ssub.s32 128, 128
      %27 = vsyncadd [#allocation6], %s26
      %s29 = sshll.u32 [#allocation5], 4
      %s30 = int_to_ptr.vmem [resolvable:$true] %s29
      %32 = dma.hbm_to_vmem [thread:$0]  %s1, 128, %s30, [#allocation6]
    $region9: #{tpu_custom_call.1} parent=1 // pred_fallthru
      _
    // Predicated region
    $region10: #{tpu_custom_call.1} parent=1 // pred_check
      _
    $region11: #{tpu_custom_call.1} parent=1 // pred_check_branch
      %34 = sbr.rel (0) target = $region13
    $region12: #{tpu_custom_call.1} parent=1 // pred_region
      _
    $region13: #{tpu_custom_call.1} parent=1 // pred_fallthru
      _
    // Predicated region
    $region14: #{tpu_custom_call.1} parent=1 // pred_check
      _
    $region15: #{tpu_custom_call.1} parent=1 // pred_check_branch
      %36 = sbr.rel (0) target = $region17
    $region16: #{tpu_custom_call.1} parent=1 // pred_region
      _
    $region17: #{tpu_custom_call.1} parent=1 // pred_fallthru
      _
    // Predicated region
    $region18: #{tpu_custom_call.1} parent=1 // pred_check
      _
    $region19: #{tpu_custom_call.1} parent=1 // pred_check_branch
      %38 = sbr.rel (0) target = $region21
    $region20: #{tpu_custom_call.1} parent=1 // pred_region
      %39 = dma.done [#allocation4], 256
    $region21: #{tpu_custom_call.1} parent=1 // pred_fallthru
      _
    // Predicated region
    $region22: #{tpu_custom_call.1} parent=1 // pred_check
      _
    $region23: #{tpu_custom_call.1} parent=1 // pred_check_branch
      %41 = sbr.rel (0) target = $region25
    $region24: #{tpu_custom_call.1} parent=1 // pred_region
      %42 = dma.done [#allocation6], 128
    $region25: #{tpu_custom_call.1} parent=1 // pred_fallthru
      _
    %v43 = vld [vmem:[#allocation3] sm:$0xff]
    %v44 = vld [vmem:[#allocation3 + $0x8] sm:$0xff]
    %v47 = vcombine.high %v43, %v43
    %v49 = vunpack.c.l.s4 1983009808
    %v50 = vunpack.c.0.s8 %v49
    %v51 = vlaneseq
    %v52 = vshrl.u32 %v51, 7
    %v53 = vsub.s32 %v50, %v52
    %v54 = vrot.slane %v43, %v53
    %v56 = vunpack.c.l.s4 1983009808
    %v57 = vunpack.c.0.s8 %v56
    %v58 = vlaneseq
    %v59 = vshrl.u32 %v58, 7
    %v60 = vsub.s32 %v57, %v59
    %v61 = vrot.slane %v47, %v60
    %v62 = vcombine.high %v54, %v54
    %v63 = vcombine.high %v61, %v61
    %v64 = vcombine.high %v44, %v44
    %v66 = vunpack.c.l.s4 1983009808
    %v67 = vunpack.c.0.s8 %v66
    %v68 = vlaneseq
    %v69 = vshrl.u32 %v68, 7
    %v70 = vsub.s32 %v67, %v69
    %v71 = vrot.slane %v44, %v70
    %v73 = vunpack.c.l.s4 1983009808
    %v74 = vunpack.c.0.s8 %v73
    %v75 = vlaneseq
    %v76 = vshrl.u32 %v75, 7
    %v77 = vsub.s32 %v74, %v76
    %v78 = vrot.slane %v64, %v77
    %v79 = vcombine.high %v71, %v71
    %v80 = vcombine.high %v78, %v78
    %89 = vrot.lane.b32.xlu0 %v54, 1
    %v90 = vpop.permute.xlu0 %89
    %91 = vrot.lane.b32.xlu0 %v62, 1
    %v92 = vpop.permute.xlu0 %91
    %93 = vrot.lane.b32.xlu0 %v61, 1
    %v94 = vpop.permute.xlu0 %93
    %95 = vrot.lane.b32.xlu0 %v63, 1
    %v96 = vpop.permute.xlu0 %95
    %97 = vrot.lane.b32.xlu0 %v71, 1
    %v98 = vpop.permute.xlu0 %97
    %99 = vrot.lane.b32.xlu0 %v79, 1
    %v100 = vpop.permute.xlu0 %99
    %101 = vrot.lane.b32.xlu0 %v78, 1
    %v102 = vpop.permute.xlu0 %101
    %103 = vrot.lane.b32.xlu0 %v80, 1
    %v104 = vpop.permute.xlu0 %103
    %v105 = vlaneseq
    %v106 = vand.u32 %v105, 127
    %vm107 = vcmp.lt.s32.totalorder %v106, 1
    %v108 = vsel %vm107, %v102, %v104
    %v109 = vsel %vm107, %v100, %v102
    %v110 = vsel %vm107, %v98, %v100
    %v111 = vsel %vm107, %v96, %v98
    %v112 = vsel %vm107, %v94, %v96
    %v113 = vsel %vm107, %v92, %v94
    %v114 = vsel %vm107, %v90, %v92
    %v115 = vsel %vm107, %v104, %v90
    %v124 = vcombine.low %v115, %v114
    %v125 = vcombine.low %v113, %v112
    %v127 = vunpack.c.l.s4 1983009808
    %v128 = vunpack.c.0.s8 %v127
    %v129 = vlaneseq
    %v130 = vshrl.u32 %v129, 7
    %v131 = vsub.s32 %v128, %v130
    %v132 = vrot.slane %v124, %v131
    %v134 = vunpack.c.l.s4 1983009808
    %v135 = vunpack.c.0.s8 %v134
    %v136 = vlaneseq
    %v137 = vshrl.u32 %v136, 7
    %v138 = vsub.s32 %v135, %v137
    %v139 = vrot.slane %v125, %v138
    %v140 = vcombine.low %v132, %v139
    %v141 = vcombine.low %v111, %v110
    %v142 = vcombine.low %v109, %v108
    %v144 = vunpack.c.l.s4 1983009808
    %v145 = vunpack.c.0.s8 %v144
    %v146 = vlaneseq
    %v147 = vshrl.u32 %v146, 7
    %v148 = vsub.s32 %v145, %v147
    %v149 = vrot.slane %v141, %v148
    %v151 = vunpack.c.l.s4 1983009808
    %v152 = vunpack.c.0.s8 %v151
    %v153 = vlaneseq
    %v154 = vshrl.u32 %v153, 7
    %v155 = vsub.s32 %v152, %v154
    %v156 = vrot.slane %v142, %v155
    %v157 = vcombine.low %v149, %v156
    %v160 = vmax.f32 %v43, %v140
    %v161 = vmax.f32 %v44, %v157
    %v164 = vcombine.high %v160, %v160
    %v166 = vunpack.c.l.s4 1983009808
    %v167 = vunpack.c.0.s8 %v166
    %v168 = vlaneseq
    %v169 = vshrl.u32 %v168, 7
    %v170 = vsub.s32 %v167, %v169
    %v171 = vrot.slane %v160, %v170
    %v173 = vunpack.c.l.s4 1983009808
    %v174 = vunpack.c.0.s8 %v173
    %v175 = vlaneseq
    %v176 = vshrl.u32 %v175, 7
    %v177 = vsub.s32 %v174, %v176
    %v178 = vrot.slane %v164, %v177
    %v179 = vcombine.high %v171, %v171
    %v180 = vcombine.high %v178, %v178
    %v181 = vcombine.high %v161, %v161
    %v183 = vunpack.c.l.s4 1983009808
    %v184 = vunpack.c.0.s8 %v183
    %v185 = vlaneseq
    %v186 = vshrl.u32 %v185, 7
    %v187 = vsub.s32 %v184, %v186
    %v188 = vrot.slane %v161, %v187
    %v190 = vunpack.c.l.s4 1983009808
    %v191 = vunpack.c.0.s8 %v190
    %v192 = vlaneseq
    %v193 = vshrl.u32 %v192, 7
    %v194 = vsub.s32 %v191, %v193
    %v195 = vrot.slane %v181, %v194
    %v196 = vcombine.high %v188, %v188
    %v197 = vcombine.high %v195, %v195
    %206 = vrot.lane.b32.xlu0 %v171, 2
    %v207 = vpop.permute.xlu0 %206
    %208 = vrot.lane.b32.xlu0 %v179, 2
    %v209 = vpop.permute.xlu0 %208
    %210 = vrot.lane.b32.xlu0 %v178, 2
    %v211 = vpop.permute.xlu0 %210
    %212 = vrot.lane.b32.xlu0 %v180, 2
    %v213 = vpop.permute.xlu0 %212
    %214 = vrot.lane.b32.xlu0 %v188, 2
    %v215 = vpop.permute.xlu0 %214
    %216 = vrot.lane.b32.xlu0 %v196, 2
    %v217 = vpop.permute.xlu0 %216
    %218 = vrot.lane.b32.xlu0 %v195, 2
    %v219 = vpop.permute.xlu0 %218
    %220 = vrot.lane.b32.xlu0 %v197, 2
    %v221 = vpop.permute.xlu0 %220
    %vm222 = vcmp.lt.s32.totalorder %v106, 2
    %v223 = vsel %vm222, %v219, %v221
    %v224 = vsel %vm222, %v217, %v219
    %v225 = vsel %vm222, %v215, %v217
    %v226 = vsel %vm222, %v213, %v215
    %v227 = vsel %vm222, %v211, %v213
    %v228 = vsel %vm222, %v209, %v211
    %v229 = vsel %vm222, %v207, %v209
    %v230 = vsel %vm222, %v221, %v207
    %v239 = vcombine.low %v230, %v229
    %v240 = vcombine.low %v228, %v227
    %v242 = vunpack.c.l.s4 1983009808
    %v243 = vunpack.c.0.s8 %v242
    %v244 = vlaneseq
    %v245 = vshrl.u32 %v244, 7
    %v246 = vsub.s32 %v243, %v245
    %v247 = vrot.slane %v239, %v246
    %v249 = vunpack.c.l.s4 1983009808
    %v250 = vunpack.c.0.s8 %v249
    %v251 = vlaneseq
    %v252 = vshrl.u32 %v251, 7
    %v253 = vsub.s32 %v250, %v252
    %v254 = vrot.slane %v240, %v253
    %v255 = vcombine.low %v247, %v254
    %v256 = vcombine.low %v226, %v225
    %v257 = vcombine.low %v224, %v223
    %v259 = vunpack.c.l.s4 1983009808
    %v260 = vunpack.c.0.s8 %v259
    %v261 = vlaneseq
    %v262 = vshrl.u32 %v261, 7
    %v263 = vsub.s32 %v260, %v262
    %v264 = vrot.slane %v256, %v263
    %v266 = vunpack.c.l.s4 1983009808
    %v267 = vunpack.c.0.s8 %v266
    %v268 = vlaneseq
    %v269 = vshrl.u32 %v268, 7
    %v270 = vsub.s32 %v267, %v269
    %v271 = vrot.slane %v257, %v270
    %v272 = vcombine.low %v264, %v271
    %v275 = vmax.f32 %v160, %v255
    %v276 = vmax.f32 %v161, %v272
    %v279 = vcombine.high %v275, %v275
    %v281 = vunpack.c.l.s4 1983009808
    %v282 = vunpack.c.0.s8 %v281
    %v283 = vlaneseq
    %v284 = vshrl.u32 %v283, 7
    %v285 = vsub.s32 %v282, %v284
    %v286 = vrot.slane %v275, %v285
    %v288 = vunpack.c.l.s4 1983009808
    %v289 = vunpack.c.0.s8 %v288
    %v290 = vlaneseq
    %v291 = vshrl.u32 %v290, 7
    %v292 = vsub.s32 %v289, %v291
    %v293 = vrot.slane %v279, %v292
    %v294 = vcombine.high %v286, %v286
    %v295 = vcombine.high %v293, %v293
    %v296 = vcombine.high %v276, %v276
    %v298 = vunpack.c.l.s4 1983009808
    %v299 = vunpack.c.0.s8 %v298
    %v300 = vlaneseq
    %v301 = vshrl.u32 %v300, 7
    %v302 = vsub.s32 %v299, %v301
    %v303 = vrot.slane %v276, %v302
    %v305 = vunpack.c.l.s4 1983009808
    %v306 = vunpack.c.0.s8 %v305
    %v307 = vlaneseq
    %v308 = vshrl.u32 %v307, 7
    %v309 = vsub.s32 %v306, %v308
    %v310 = vrot.slane %v296, %v309
    %v311 = vcombine.high %v303, %v303
    %v312 = vcombine.high %v310, %v310
    %321 = vrot.lane.b32.xlu0 %v286, 4
    %v322 = vpop.permute.xlu0 %321
    %323 = vrot.lane.b32.xlu0 %v294, 4
    %v324 = vpop.permute.xlu0 %323
    %325 = vrot.lane.b32.xlu0 %v293, 4
    %v326 = vpop.permute.xlu0 %325
    %327 = vrot.lane.b32.xlu0 %v295, 4
    %v328 = vpop.permute.xlu0 %327
    %329 = vrot.lane.b32.xlu0 %v303, 4
    %v330 = vpop.permute.xlu0 %329
    %331 = vrot.lane.b32.xlu0 %v311, 4
    %v332 = vpop.permute.xlu0 %331
    %333 = vrot.lane.b32.xlu0 %v310, 4
    %v334 = vpop.permute.xlu0 %333
    %335 = vrot.lane.b32.xlu0 %v312, 4
    %v336 = vpop.permute.xlu0 %335
    %vm337 = vcmp.lt.s32.totalorder %v106, 4
    %v338 = vsel %vm337, %v334, %v336
    %v339 = vsel %vm337, %v332, %v334
    %v340 = vsel %vm337, %v330, %v332
    %v341 = vsel %vm337, %v328, %v330
    %v342 = vsel %vm337, %v326, %v328
    %v343 = vsel %vm337, %v324, %v326
    %v344 = vsel %vm337, %v322, %v324
    %v345 = vsel %vm337, %v336, %v322
    %v354 = vcombine.low %v345, %v344
    %v355 = vcombine.low %v343, %v342
    %v357 = vunpack.c.l.s4 1983009808
    %v358 = vunpack.c.0.s8 %v357
    %v359 = vlaneseq
    %v360 = vshrl.u32 %v359, 7
    %v361 = vsub.s32 %v358, %v360
    %v362 = vrot.slane %v354, %v361
    %v364 = vunpack.c.l.s4 1983009808
    %v365 = vunpack.c.0.s8 %v364
    %v366 = vlaneseq
    %v367 = vshrl.u32 %v366, 7
    %v368 = vsub.s32 %v365, %v367
    %v369 = vrot.slane %v355, %v368
    %v370 = vcombine.low %v362, %v369
    %v371 = vcombine.low %v341, %v340
    %v372 = vcombine.low %v339, %v338
    %v374 = vunpack.c.l.s4 1983009808
    %v375 = vunpack.c.0.s8 %v374
    %v376 = vlaneseq
    %v377 = vshrl.u32 %v376, 7
    %v378 = vsub.s32 %v375, %v377
    %v379 = vrot.slane %v371, %v378
    %v381 = vunpack.c.l.s4 1983009808
    %v382 = vunpack.c.0.s8 %v381
    %v383 = vlaneseq
    %v384 = vshrl.u32 %v383, 7
    %v385 = vsub.s32 %v382, %v384
    %v386 = vrot.slane %v372, %v385
    %v387 = vcombine.low %v379, %v386
    %v390 = vmax.f32 %v275, %v370
    %v391 = vmax.f32 %v276, %v387
    %v394 = vcombine.high %v390, %v390
    %v396 = vunpack.c.l.s4 1983009808
    %v397 = vunpack.c.0.s8 %v396
    %v398 = vlaneseq
    %v399 = vshrl.u32 %v398, 7
    %v400 = vsub.s32 %v397, %v399
    %v401 = vrot.slane %v390, %v400
    %v403 = vunpack.c.l.s4 1983009808
    %v404 = vunpack.c.0.s8 %v403
    %v405 = vlaneseq
    %v406 = vshrl.u32 %v405, 7
    %v407 = vsub.s32 %v404, %v406
    %v408 = vrot.slane %v394, %v407
    %v409 = vcombine.high %v401, %v401
    %v410 = vcombine.high %v408, %v408
    %v411 = vcombine.high %v391, %v391
    %v413 = vunpack.c.l.s4 1983009808
    %v414 = vunpack.c.0.s8 %v413
    %v415 = vlaneseq
    %v416 = vshrl.u32 %v415, 7
    %v417 = vsub.s32 %v414, %v416
    %v418 = vrot.slane %v391, %v417
    %v420 = vunpack.c.l.s4 1983009808
    %v421 = vunpack.c.0.s8 %v420
    %v422 = vlaneseq
    %v423 = vshrl.u32 %v422, 7
    %v424 = vsub.s32 %v421, %v423
    %v425 = vrot.slane %v411, %v424
    %v426 = vcombine.high %v418, %v418
    %v427 = vcombine.high %v425, %v425
    %436 = vrot.lane.b32.xlu0 %v401, 8
    %v437 = vpop.permute.xlu0 %436
    %438 = vrot.lane.b32.xlu0 %v409, 8
    %v439 = vpop.permute.xlu0 %438
    %440 = vrot.lane.b32.xlu0 %v408, 8
    %v441 = vpop.permute.xlu0 %440
    %442 = vrot.lane.b32.xlu0 %v410, 8
    %v443 = vpop.permute.xlu0 %442
    %444 = vrot.lane.b32.xlu0 %v418, 8
    %v445 = vpop.permute.xlu0 %444
    %446 = vrot.lane.b32.xlu0 %v426, 8
    %v447 = vpop.permute.xlu0 %446
    %448 = vrot.lane.b32.xlu0 %v425, 8
    %v449 = vpop.permute.xlu0 %448
    %450 = vrot.lane.b32.xlu0 %v427, 8
    %v451 = vpop.permute.xlu0 %450
    %vm452 = vcmp.lt.s32.totalorder %v106, 8
    %v453 = vsel %vm452, %v449, %v451
    %v454 = vsel %vm452, %v447, %v449
    %v455 = vsel %vm452, %v445, %v447
    %v456 = vsel %vm452, %v443, %v445
    %v457 = vsel %vm452, %v441, %v443
    %v458 = vsel %vm452, %v439, %v441
    %v459 = vsel %vm452, %v437, %v439
    %v460 = vsel %vm452, %v451, %v437
    %v469 = vcombine.low %v460, %v459
    %v470 = vcombine.low %v458, %v457
    %v472 = vunpack.c.l.s4 1983009808
    %v473 = vunpack.c.0.s8 %v472
    %v474 = vlaneseq
    %v475 = vshrl.u32 %v474, 7
    %v476 = vsub.s32 %v473, %v475
    %v477 = vrot.slane %v469, %v476
    %v479 = vunpack.c.l.s4 1983009808
    %v480 = vunpack.c.0.s8 %v479
    %v481 = vlaneseq
    %v482 = vshrl.u32 %v481, 7
    %v483 = vsub.s32 %v480, %v482
    %v484 = vrot.slane %v470, %v483
    %v485 = vcombine.low %v477, %v484
    %v486 = vcombine.low %v456, %v455
    %v487 = vcombine.low %v454, %v453
    %v489 = vunpack.c.l.s4 1983009808
    %v490 = vunpack.c.0.s8 %v489
    %v491 = vlaneseq
    %v492 = vshrl.u32 %v491, 7
    %v493 = vsub.s32 %v490, %v492
    %v494 = vrot.slane %v486, %v493
    %v496 = vunpack.c.l.s4 1983009808
    %v497 = vunpack.c.0.s8 %v496
    %v498 = vlaneseq
    %v499 = vshrl.u32 %v498, 7
    %v500 = vsub.s32 %v497, %v499
    %v501 = vrot.slane %v487, %v500
    %v502 = vcombine.low %v494, %v501
    %v505 = vmax.f32 %v390, %v485
    %v506 = vmax.f32 %v391, %v502
    %v507 = vld [vmem:[%s2] sm:$0xff]
    %v508 = vlaneseq
    %v509 = vshrl.u32 %v508, 7
    %v510 = vsub.s32 0, %v509
    %v511 = vrot.slane %v507, %v510
    %v512 = vlaneseq
    %v513 = vshrl.u32 %v512, 7
    %v514 = vsub.s32 1, %v513
    %v515 = vrot.slane %v507, %v514
    %v516 = vlaneseq
    %v517 = vshrl.u32 %v516, 7
    %v518 = vsub.s32 2, %v517
    %v519 = vrot.slane %v507, %v518
    %v520 = vlaneseq
    %v521 = vshrl.u32 %v520, 7
    %v522 = vsub.s32 3, %v521
    %v523 = vrot.slane %v507, %v522
    %v524 = vlaneseq
    %v525 = vshrl.u32 %v524, 7
    %v526 = vsub.s32 4, %v525
    %v527 = vrot.slane %v507, %v526
    %v528 = vlaneseq
    %v529 = vshrl.u32 %v528, 7
    %v530 = vsub.s32 5, %v529
    %v531 = vrot.slane %v507, %v530
    %v532 = vlaneseq
    %v533 = vshrl.u32 %v532, 7
    %v534 = vsub.s32 6, %v533
    %v535 = vrot.slane %v507, %v534
    %v536 = vlaneseq
    %v537 = vshrl.u32 %v536, 7
    %v538 = vsub.s32 7, %v537
    %v539 = vrot.slane %v507, %v538
    %540 = vrot.lane.b32.xlu0 %v511, 1
    %v541 = vpop.permute.xlu0 %540
    %542 = vrot.lane.b32.xlu0 %v515, 1
    %v543 = vpop.permute.xlu0 %542
    %544 = vrot.lane.b32.xlu0 %v519, 1
    %v545 = vpop.permute.xlu0 %544
    %546 = vrot.lane.b32.xlu0 %v523, 1
    %v547 = vpop.permute.xlu0 %546
    %548 = vrot.lane.b32.xlu0 %v527, 1
    %v549 = vpop.permute.xlu0 %548
    %550 = vrot.lane.b32.xlu0 %v531, 1
    %v551 = vpop.permute.xlu0 %550
    %552 = vrot.lane.b32.xlu0 %v535, 1
    %v553 = vpop.permute.xlu0 %552
    %554 = vrot.lane.b32.xlu0 %v539, 1
    %v555 = vpop.permute.xlu0 %554
    %v556 = vsel %vm107, %v553, %v555
    %v557 = vsel %vm107, %v551, %v553
    %v558 = vsel %vm107, %v549, %v551
    %v559 = vsel %vm107, %v547, %v549
    %v560 = vsel %vm107, %v545, %v547
    %v561 = vsel %vm107, %v543, %v545
    %v562 = vsel %vm107, %v541, %v543
    %v563 = vsel %vm107, %v555, %v541
    %v564 = vcombine.low %v563, %v562
    %v565 = vcombine.low %v561, %v560
    %v566 = vcombine.low %v559, %v558
    %v567 = vcombine.low %v557, %v556
    %v569 = vunpack.c.l.s4 1966171168
    %v570 = vunpack.c.0.s8 %v569
    %v571 = vlaneseq
    %v572 = vshrl.u32 %v571, 7
    %v573 = vsub.s32 %v570, %v572
    %v574 = vrot.slane %v564, %v573
    %v576 = vunpack.c.l.s4 1966171168
    %v577 = vunpack.c.0.s8 %v576
    %v578 = vlaneseq
    %v579 = vshrl.u32 %v578, 7
    %v580 = vsub.s32 %v577, %v579
    %v581 = vrot.slane %v565, %v580
    %v583 = vunpack.c.l.s4 1966171168
    %v584 = vunpack.c.0.s8 %v583
    %v585 = vlaneseq
    %v586 = vshrl.u32 %v585, 7
    %v587 = vsub.s32 %v584, %v586
    %v588 = vrot.slane %v566, %v587
    %v590 = vunpack.c.l.s4 1966171168
    %v591 = vunpack.c.0.s8 %v590
    %v592 = vlaneseq
    %v593 = vshrl.u32 %v592, 7
    %v594 = vsub.s32 %v591, %v593
    %v595 = vrot.slane %v567, %v594
    %v596 = vcombine.low %v574, %v581
    %v597 = vcombine.low %v588, %v595
    %v599 = vunpack.c.l.s4 1966171168
    %v600 = vunpack.c.0.s8 %v599
    %v601 = vlaneseq
    %v602 = vshrl.u32 %v601, 7
    %v603 = vsub.s32 %v600, %v602
    %v604 = vrot.slane %v596, %v603
    %v606 = vunpack.c.l.s4 1966171168
    %v607 = vunpack.c.0.s8 %v606
    %v608 = vlaneseq
    %v609 = vshrl.u32 %v608, 7
    %v610 = vsub.s32 %v607, %v609
    %v611 = vrot.slane %v597, %v610
    %v612 = vcombine.low %v604, %v611
    %vm613 = vcmp.lt.s32.totalorder %v507, %v612
    %v614 = vsel %vm613, %v507, %v612
    %v615 = vlaneseq
    %v616 = vshrl.u32 %v615, 7
    %v617 = vsub.s32 0, %v616
    %v618 = vrot.slane %v614, %v617
    %v619 = vlaneseq
    %v620 = vshrl.u32 %v619, 7
    %v621 = vsub.s32 1, %v620
    %v622 = vrot.slane %v614, %v621
    %v623 = vlaneseq
    %v624 = vshrl.u32 %v623, 7
    %v625 = vsub.s32 2, %v624
    %v626 = vrot.slane %v614, %v625
    %v627 = vlaneseq
    %v628 = vshrl.u32 %v627, 7
    %v629 = vsub.s32 3, %v628
    %v630 = vrot.slane %v614, %v629
    %v631 = vlaneseq
    %v632 = vshrl.u32 %v631, 7
    %v633 = vsub.s32 4, %v632
    %v634 = vrot.slane %v614, %v633
    %v635 = vlaneseq
    %v636 = vshrl.u32 %v635, 7
    %v637 = vsub.s32 5, %v636
    %v638 = vrot.slane %v614, %v637
    %v639 = vlaneseq
    %v640 = vshrl.u32 %v639, 7
    %v641 = vsub.s32 6, %v640
    %v642 = vrot.slane %v614, %v641
    %v643 = vlaneseq
    %v644 = vshrl.u32 %v643, 7
    %v645 = vsub.s32 7, %v644
    %v646 = vrot.slane %v614, %v645
    %647 = vrot.lane.b32.xlu0 %v618, 2
    %v648 = vpop.permute.xlu0 %647
    %649 = vrot.lane.b32.xlu0 %v622, 2
    %v650 = vpop.permute.xlu0 %649
    %651 = vrot.lane.b32.xlu0 %v626, 2
    %v652 = vpop.permute.xlu0 %651
    %653 = vrot.lane.b32.xlu0 %v630, 2
    %v654 = vpop.permute.xlu0 %653
    %655 = vrot.lane.b32.xlu0 %v634, 2
    %v656 = vpop.permute.xlu0 %655
    %657 = vrot.lane.b32.xlu0 %v638, 2
    %v658 = vpop.permute.xlu0 %657
    %659 = vrot.lane.b32.xlu0 %v642, 2
    %v660 = vpop.permute.xlu0 %659
    %661 = vrot.lane.b32.xlu0 %v646, 2
    %v662 = vpop.permute.xlu0 %661
    %v663 = vsel %vm222, %v660, %v662
    %v664 = vsel %vm222, %v658, %v660
    %v665 = vsel %vm222, %v656, %v658
    %v666 = vsel %vm222, %v654, %v656
    %v667 = vsel %vm222, %v652, %v654
    %v668 = vsel %vm222, %v650, %v652
    %v669 = vsel %vm222, %v648, %v650
    %v670 = vsel %vm222, %v662, %v648
    %v671 = vcombine.low %v670, %v669
    %v672 = vcombine.low %v668, %v667
    %v673 = vcombine.low %v666, %v665
    %v674 = vcombine.low %v664, %v663
    %v676 = vunpack.c.l.s4 1966171168
    %v677 = vunpack.c.0.s8 %v676
    %v678 = vlaneseq
    %v679 = vshrl.u32 %v678, 7
    %v680 = vsub.s32 %v677, %v679
    %v681 = vrot.slane %v671, %v680
    %v683 = vunpack.c.l.s4 1966171168
    %v684 = vunpack.c.0.s8 %v683
    %v685 = vlaneseq
    %v686 = vshrl.u32 %v685, 7
    %v687 = vsub.s32 %v684, %v686
    %v688 = vrot.slane %v672, %v687
    %v690 = vunpack.c.l.s4 1966171168
    %v691 = vunpack.c.0.s8 %v690
    %v692 = vlaneseq
    %v693 = vshrl.u32 %v692, 7
    %v694 = vsub.s32 %v691, %v693
    %v695 = vrot.slane %v673, %v694
    %v697 = vunpack.c.l.s4 1966171168
    %v698 = vunpack.c.0.s8 %v697
    %v699 = vlaneseq
    %v700 = vshrl.u32 %v699, 7
    %v701 = vsub.s32 %v698, %v700
    %v702 = vrot.slane %v674, %v701
    %v703 = vcombine.low %v681, %v688
    %v704 = vcombine.low %v695, %v702
    %v706 = vunpack.c.l.s4 1966171168
    %v707 = vunpack.c.0.s8 %v706
    %v708 = vlaneseq
    %v709 = vshrl.u32 %v708, 7
    %v710 = vsub.s32 %v707, %v709
    %v711 = vrot.slane %v703, %v710
    %v713 = vunpack.c.l.s4 1966171168
    %v714 = vunpack.c.0.s8 %v713
    %v715 = vlaneseq
    %v716 = vshrl.u32 %v715, 7
    %v717 = vsub.s32 %v714, %v716
    %v718 = vrot.slane %v704, %v717
    %v719 = vcombine.low %v711, %v718
    %vm720 = vcmp.lt.s32.totalorder %v614, %v719
    %v721 = vsel %vm720, %v614, %v719
    %v722 = vlaneseq
    %v723 = vshrl.u32 %v722, 7
    %v724 = vsub.s32 0, %v723
    %v725 = vrot.slane %v721, %v724
    %v726 = vlaneseq
    %v727 = vshrl.u32 %v726, 7
    %v728 = vsub.s32 1, %v727
    %v729 = vrot.slane %v721, %v728
    %v730 = vlaneseq
    %v731 = vshrl.u32 %v730, 7
    %v732 = vsub.s32 2, %v731
    %v733 = vrot.slane %v721, %v732
    %v734 = vlaneseq
    %v735 = vshrl.u32 %v734, 7
    %v736 = vsub.s32 3, %v735
    %v737 = vrot.slane %v721, %v736
    %v738 = vlaneseq
    %v739 = vshrl.u32 %v738, 7
    %v740 = vsub.s32 4, %v739
    %v741 = vrot.slane %v721, %v740
    %v742 = vlaneseq
    %v743 = vshrl.u32 %v742, 7
    %v744 = vsub.s32 5, %v743
    %v745 = vrot.slane %v721, %v744
    %v746 = vlaneseq
    %v747 = vshrl.u32 %v746, 7
    %v748 = vsub.s32 6, %v747
    %v749 = vrot.slane %v721, %v748
    %v750 = vlaneseq
    %v751 = vshrl.u32 %v750, 7
    %v752 = vsub.s32 7, %v751
    %v753 = vrot.slane %v721, %v752
    %754 = vrot.lane.b32.xlu0 %v725, 4
    %v755 = vpop.permute.xlu0 %754
    %756 = vrot.lane.b32.xlu0 %v729, 4
    %v757 = vpop.permute.xlu0 %756
    %758 = vrot.lane.b32.xlu0 %v733, 4
    %v759 = vpop.permute.xlu0 %758
    %760 = vrot.lane.b32.xlu0 %v737, 4
    %v761 = vpop.permute.xlu0 %760
    %762 = vrot.lane.b32.xlu0 %v741, 4
    %v763 = vpop.permute.xlu0 %762
    %764 = vrot.lane.b32.xlu0 %v745, 4
    %v765 = vpop.permute.xlu0 %764
    %766 = vrot.lane.b32.xlu0 %v749, 4
    %v767 = vpop.permute.xlu0 %766
    %768 = vrot.lane.b32.xlu0 %v753, 4
    %v769 = vpop.permute.xlu0 %768
    %v770 = vsel %vm337, %v767, %v769
    %v771 = vsel %vm337, %v765, %v767
    %v772 = vsel %vm337, %v763, %v765
    %v773 = vsel %vm337, %v761, %v763
    %v774 = vsel %vm337, %v759, %v761
    %v775 = vsel %vm337, %v757, %v759
    %v776 = vsel %vm337, %v755, %v757
    %v777 = vsel %vm337, %v769, %v755
    %v778 = vcombine.low %v777, %v776
    %v779 = vcombine.low %v775, %v774
    %v780 = vcombine.low %v773, %v772
    %v781 = vcombine.low %v771, %v770
    %v783 = vunpack.c.l.s4 1966171168
    %v784 = vunpack.c.0.s8 %v783
    %v785 = vlaneseq
    %v786 = vshrl.u32 %v785, 7
    %v787 = vsub.s32 %v784, %v786
    %v788 = vrot.slane %v778, %v787
    %v790 = vunpack.c.l.s4 1966171168
    %v791 = vunpack.c.0.s8 %v790
    %v792 = vlaneseq
    %v793 = vshrl.u32 %v792, 7
    %v794 = vsub.s32 %v791, %v793
    %v795 = vrot.slane %v779, %v794
    %v797 = vunpack.c.l.s4 1966171168
    %v798 = vunpack.c.0.s8 %v797
    %v799 = vlaneseq
    %v800 = vshrl.u32 %v799, 7
    %v801 = vsub.s32 %v798, %v800
    %v802 = vrot.slane %v780, %v801
    %v804 = vunpack.c.l.s4 1966171168
    %v805 = vunpack.c.0.s8 %v804
    %v806 = vlaneseq
    %v807 = vshrl.u32 %v806, 7
    %v808 = vsub.s32 %v805, %v807
    %v809 = vrot.slane %v781, %v808
    %v810 = vcombine.low %v788, %v795
    %v811 = vcombine.low %v802, %v809
    %v813 = vunpack.c.l.s4 1966171168
    %v814 = vunpack.c.0.s8 %v813
    %v815 = vlaneseq
    %v816 = vshrl.u32 %v815, 7
    %v817 = vsub.s32 %v814, %v816
    %v818 = vrot.slane %v810, %v817
    %v820 = vunpack.c.l.s4 1966171168
    %v821 = vunpack.c.0.s8 %v820
    %v822 = vlaneseq
    %v823 = vshrl.u32 %v822, 7
    %v824 = vsub.s32 %v821, %v823
    %v825 = vrot.slane %v811, %v824
    %v826 = vcombine.low %v818, %v825
    %vm827 = vcmp.lt.s32.totalorder %v721, %v826
    %v828 = vsel %vm827, %v721, %v826
    %v829 = vlaneseq
    %v830 = vshrl.u32 %v829, 7
    %v831 = vsub.s32 0, %v830
    %v832 = vrot.slane %v828, %v831
    %v833 = vlaneseq
    %v834 = vshrl.u32 %v833, 7
    %v835 = vsub.s32 1, %v834
    %v836 = vrot.slane %v828, %v835
    %v837 = vlaneseq
    %v838 = vshrl.u32 %v837, 7
    %v839 = vsub.s32 2, %v838
    %v840 = vrot.slane %v828, %v839
    %v841 = vlaneseq
    %v842 = vshrl.u32 %v841, 7
    %v843 = vsub.s32 3, %v842
    %v844 = vrot.slane %v828, %v843
    %v845 = vlaneseq
    %v846 = vshrl.u32 %v845, 7
    %v847 = vsub.s32 4, %v846
    %v848 = vrot.slane %v828, %v847
    %v849 = vlaneseq
    %v850 = vshrl.u32 %v849, 7
    %v851 = vsub.s32 5, %v850
    %v852 = vrot.slane %v828, %v851
    %v853 = vlaneseq
    %v854 = vshrl.u32 %v853, 7
    %v855 = vsub.s32 6, %v854
    %v856 = vrot.slane %v828, %v855
    %v857 = vlaneseq
    %v858 = vshrl.u32 %v857, 7
    %v859 = vsub.s32 7, %v858
    %v860 = vrot.slane %v828, %v859
    %861 = vrot.lane.b32.xlu0 %v832, 8
    %v862 = vpop.permute.xlu0 %861
    %863 = vrot.lane.b32.xlu0 %v836, 8
    %v864 = vpop.permute.xlu0 %863
    %865 = vrot.lane.b32.xlu0 %v840, 8
    %v866 = vpop.permute.xlu0 %865
    %867 = vrot.lane.b32.xlu0 %v844, 8
    %v868 = vpop.permute.xlu0 %867
    %869 = vrot.lane.b32.xlu0 %v848, 8
    %v870 = vpop.permute.xlu0 %869
    %871 = vrot.lane.b32.xlu0 %v852, 8
    %v872 = vpop.permute.xlu0 %871
    %873 = vrot.lane.b32.xlu0 %v856, 8
    %v874 = vpop.permute.xlu0 %873
    %875 = vrot.lane.b32.xlu0 %v860, 8
    %v876 = vpop.permute.xlu0 %875
    %v877 = vsel %vm452, %v874, %v876
    %v878 = vsel %vm452, %v872, %v874
    %v879 = vsel %vm452, %v870, %v872
    %v880 = vsel %vm452, %v868, %v870
    %v881 = vsel %vm452, %v866, %v868
    %v882 = vsel %vm452, %v864, %v866
    %v883 = vsel %vm452, %v862, %v864
    %v884 = vsel %vm452, %v876, %v862
    %v885 = vcombine.low %v884, %v883
    %v886 = vcombine.low %v882, %v881
    %v887 = vcombine.low %v880, %v879
    %v888 = vcombine.low %v878, %v877
    %v890 = vunpack.c.l.s4 1966171168
    %v891 = vunpack.c.0.s8 %v890
    %v892 = vlaneseq
    %v893 = vshrl.u32 %v892, 7
    %v894 = vsub.s32 %v891, %v893
    %v895 = vrot.slane %v885, %v894
    %v897 = vunpack.c.l.s4 1966171168
    %v898 = vunpack.c.0.s8 %v897
    %v899 = vlaneseq
    %v900 = vshrl.u32 %v899, 7
    %v901 = vsub.s32 %v898, %v900
    %v902 = vrot.slane %v886, %v901
    %v904 = vunpack.c.l.s4 1966171168
    %v905 = vunpack.c.0.s8 %v904
    %v906 = vlaneseq
    %v907 = vshrl.u32 %v906, 7
    %v908 = vsub.s32 %v905, %v907
    %v909 = vrot.slane %v887, %v908
    %v911 = vunpack.c.l.s4 1966171168
    %v912 = vunpack.c.0.s8 %v911
    %v913 = vlaneseq
    %v914 = vshrl.u32 %v913, 7
    %v915 = vsub.s32 %v912, %v914
    %v916 = vrot.slane %v888, %v915
    %v917 = vcombine.low %v895, %v902
    %v918 = vcombine.low %v909, %v916
    %v920 = vunpack.c.l.s4 1966171168
    %v921 = vunpack.c.0.s8 %v920
    %v922 = vlaneseq
    %v923 = vshrl.u32 %v922, 7
    %v924 = vsub.s32 %v921, %v923
    %v925 = vrot.slane %v917, %v924
    %v927 = vunpack.c.l.s4 1966171168
    %v928 = vunpack.c.0.s8 %v927
    %v929 = vlaneseq
    %v930 = vshrl.u32 %v929, 7
    %v931 = vsub.s32 %v928, %v930
    %v932 = vrot.slane %v918, %v931
    %v933 = vcombine.low %v925, %v932
    %vm934 = vcmp.lt.s32.totalorder %v828, %v933
    %v935 = vsel %vm934, %v828, %v933
    %vm936 = vcmp.gt.s32.totalorder %v507, %v612
    %v937 = vsel %vm936, %v507, %v612
    %v938 = vlaneseq
    %v939 = vshrl.u32 %v938, 7
    %v940 = vsub.s32 0, %v939
    %v941 = vrot.slane %v937, %v940
    %v942 = vlaneseq
    %v943 = vshrl.u32 %v942, 7
    %v944 = vsub.s32 1, %v943
    %v945 = vrot.slane %v937, %v944
    %v946 = vlaneseq
    %v947 = vshrl.u32 %v946, 7
    %v948 = vsub.s32 2, %v947
    %v949 = vrot.slane %v937, %v948
    %v950 = vlaneseq
    %v951 = vshrl.u32 %v950, 7
    %v952 = vsub.s32 3, %v951
    %v953 = vrot.slane %v937, %v952
    %v954 = vlaneseq
    %v955 = vshrl.u32 %v954, 7
    %v956 = vsub.s32 4, %v955
    %v957 = vrot.slane %v937, %v956
    %v958 = vlaneseq
    %v959 = vshrl.u32 %v958, 7
    %v960 = vsub.s32 5, %v959
    %v961 = vrot.slane %v937, %v960
    %v962 = vlaneseq
    %v963 = vshrl.u32 %v962, 7
    %v964 = vsub.s32 6, %v963
    %v965 = vrot.slane %v937, %v964
    %v966 = vlaneseq
    %v967 = vshrl.u32 %v966, 7
    %v968 = vsub.s32 7, %v967
    %v969 = vrot.slane %v937, %v968
    %970 = vrot.lane.b32.xlu0 %v941, 2
    %v971 = vpop.permute.xlu0 %970
    %972 = vrot.lane.b32.xlu0 %v945, 2
    %v973 = vpop.permute.xlu0 %972
    %974 = vrot.lane.b32.xlu0 %v949, 2
    %v975 = vpop.permute.xlu0 %974
    %976 = vrot.lane.b32.xlu0 %v953, 2
    %v977 = vpop.permute.xlu0 %976
    %978 = vrot.lane.b32.xlu0 %v957, 2
    %v979 = vpop.permute.xlu0 %978
    %980 = vrot.lane.b32.xlu0 %v961, 2
    %v981 = vpop.permute.xlu0 %980
    %982 = vrot.lane.b32.xlu0 %v965, 2
    %v983 = vpop.permute.xlu0 %982
    %984 = vrot.lane.b32.xlu0 %v969, 2
    %v985 = vpop.permute.xlu0 %984
    %v986 = vsel %vm222, %v983, %v985
    %v987 = vsel %vm222, %v981, %v983
    %v988 = vsel %vm222, %v979, %v981
    %v989 = vsel %vm222, %v977, %v979
    %v990 = vsel %vm222, %v975, %v977
    %v991 = vsel %vm222, %v973, %v975
    %v992 = vsel %vm222, %v971, %v973
    %v993 = vsel %vm222, %v985, %v971
    %v994 = vcombine.low %v993, %v992
    %v995 = vcombine.low %v991, %v990
    %v996 = vcombine.low %v989, %v988
    %v997 = vcombine.low %v987, %v986
    %v999 = vunpack.c.l.s4 1966171168
    %v1000 = vunpack.c.0.s8 %v999
    %v1001 = vlaneseq
    %v1002 = vshrl.u32 %v1001, 7
    %v1003 = vsub.s32 %v1000, %v1002
    %v1004 = vrot.slane %v994, %v1003
    %v1006 = vunpack.c.l.s4 1966171168
    %v1007 = vunpack.c.0.s8 %v1006
    %v1008 = vlaneseq
    %v1009 = vshrl.u32 %v1008, 7
    %v1010 = vsub.s32 %v1007, %v1009
    %v1011 = vrot.slane %v995, %v1010
    %v1013 = vunpack.c.l.s4 1966171168
    %v1014 = vunpack.c.0.s8 %v1013
    %v1015 = vlaneseq
    %v1016 = vshrl.u32 %v1015, 7
    %v1017 = vsub.s32 %v1014, %v1016
    %v1018 = vrot.slane %v996, %v1017
    %v1020 = vunpack.c.l.s4 1966171168
    %v1021 = vunpack.c.0.s8 %v1020
    %v1022 = vlaneseq
    %v1023 = vshrl.u32 %v1022, 7
    %v1024 = vsub.s32 %v1021, %v1023
    %v1025 = vrot.slane %v997, %v1024
    %v1026 = vcombine.low %v1004, %v1011
    %v1027 = vcombine.low %v1018, %v1025
    %v1029 = vunpack.c.l.s4 1966171168
    %v1030 = vunpack.c.0.s8 %v1029
    %v1031 = vlaneseq
    %v1032 = vshrl.u32 %v1031, 7
    %v1033 = vsub.s32 %v1030, %v1032
    %v1034 = vrot.slane %v1026, %v1033
    %v1036 = vunpack.c.l.s4 1966171168
    %v1037 = vunpack.c.0.s8 %v1036
    %v1038 = vlaneseq
    %v1039 = vshrl.u32 %v1038, 7
    %v1040 = vsub.s32 %v1037, %v1039
    %v1041 = vrot.slane %v1027, %v1040
    %v1042 = vcombine.low %v1034, %v1041
    %vm1043 = vcmp.gt.s32.totalorder %v937, %v1042
    %v1044 = vsel %vm1043, %v937, %v1042
    %v1045 = vlaneseq
    %v1046 = vshrl.u32 %v1045, 7
    %v1047 = vsub.s32 0, %v1046
    %v1048 = vrot.slane %v1044, %v1047
    %v1049 = vlaneseq
    %v1050 = vshrl.u32 %v1049, 7
    %v1051 = vsub.s32 1, %v1050
    %v1052 = vrot.slane %v1044, %v1051
    %v1053 = vlaneseq
    %v1054 = vshrl.u32 %v1053, 7
    %v1055 = vsub.s32 2, %v1054
    %v1056 = vrot.slane %v1044, %v1055
    %v1057 = vlaneseq
    %v1058 = vshrl.u32 %v1057, 7
    %v1059 = vsub.s32 3, %v1058
    %v1060 = vrot.slane %v1044, %v1059
    %v1061 = vlaneseq
    %v1062 = vshrl.u32 %v1061, 7
    %v1063 = vsub.s32 4, %v1062
    %v1064 = vrot.slane %v1044, %v1063
    %v1065 = vlaneseq
    %v1066 = vshrl.u32 %v1065, 7
    %v1067 = vsub.s32 5, %v1066
    %v1068 = vrot.slane %v1044, %v1067
    %v1069 = vlaneseq
    %v1070 = vshrl.u32 %v1069, 7
    %v1071 = vsub.s32 6, %v1070
    %v1072 = vrot.slane %v1044, %v1071
    %v1073 = vlaneseq
    %v1074 = vshrl.u32 %v1073, 7
    %v1075 = vsub.s32 7, %v1074
    %v1076 = vrot.slane %v1044, %v1075
    %1077 = vrot.lane.b32.xlu0 %v1048, 4
    %v1078 = vpop.permute.xlu0 %1077
    %1079 = vrot.lane.b32.xlu0 %v1052, 4
    %v1080 = vpop.permute.xlu0 %1079
    %1081 = vrot.lane.b32.xlu0 %v1056, 4
    %v1082 = vpop.permute.xlu0 %1081
    %1083 = vrot.lane.b32.xlu0 %v1060, 4
    %v1084 = vpop.permute.xlu0 %1083
    %1085 = vrot.lane.b32.xlu0 %v1064, 4
    %v1086 = vpop.permute.xlu0 %1085
    %1087 = vrot.lane.b32.xlu0 %v1068, 4
    %v1088 = vpop.permute.xlu0 %1087
    %1089 = vrot.lane.b32.xlu0 %v1072, 4
    %v1090 = vpop.permute.xlu0 %1089
    %1091 = vrot.lane.b32.xlu0 %v1076, 4
    %v1092 = vpop.permute.xlu0 %1091
    %v1093 = vsel %vm337, %v1090, %v1092
    %v1094 = vsel %vm337, %v1088, %v1090
    %v1095 = vsel %vm337, %v1086, %v1088
    %v1096 = vsel %vm337, %v1084, %v1086
    %v1097 = vsel %vm337, %v1082, %v1084
    %v1098 = vsel %vm337, %v1080, %v1082
    %v1099 = vsel %vm337, %v1078, %v1080
    %v1100 = vsel %vm337, %v1092, %v1078
    %v1101 = vcombine.low %v1100, %v1099
    %v1102 = vcombine.low %v1098, %v1097
    %v1103 = vcombine.low %v1096, %v1095
    %v1104 = vcombine.low %v1094, %v1093
    %v1106 = vunpack.c.l.s4 1966171168
    %v1107 = vunpack.c.0.s8 %v1106
    %v1108 = vlaneseq
    %v1109 = vshrl.u32 %v1108, 7
    %v1110 = vsub.s32 %v1107, %v1109
    %v1111 = vrot.slane %v1101, %v1110
    %v1113 = vunpack.c.l.s4 1966171168
    %v1114 = vunpack.c.0.s8 %v1113
    %v1115 = vlaneseq
    %v1116 = vshrl.u32 %v1115, 7
    %v1117 = vsub.s32 %v1114, %v1116
    %v1118 = vrot.slane %v1102, %v1117
    %v1120 = vunpack.c.l.s4 1966171168
    %v1121 = vunpack.c.0.s8 %v1120
    %v1122 = vlaneseq
    %v1123 = vshrl.u32 %v1122, 7
    %v1124 = vsub.s32 %v1121, %v1123
    %v1125 = vrot.slane %v1103, %v1124
    %v1127 = vunpack.c.l.s4 1966171168
    %v1128 = vunpack.c.0.s8 %v1127
    %v1129 = vlaneseq
    %v1130 = vshrl.u32 %v1129, 7
    %v1131 = vsub.s32 %v1128, %v1130
    %v1132 = vrot.slane %v1104, %v1131
    %v1133 = vcombine.low %v1111, %v1118
    %v1134 = vcombine.low %v1125, %v1132
    %v1136 = vunpack.c.l.s4 1966171168
    %v1137 = vunpack.c.0.s8 %v1136
    %v1138 = vlaneseq
    %v1139 = vshrl.u32 %v1138, 7
    %v1140 = vsub.s32 %v1137, %v1139
    %v1141 = vrot.slane %v1133, %v1140
    %v1143 = vunpack.c.l.s4 1966171168
    %v1144 = vunpack.c.0.s8 %v1143
    %v1145 = vlaneseq
    %v1146 = vshrl.u32 %v1145, 7
    %v1147 = vsub.s32 %v1144, %v1146
    %v1148 = vrot.slane %v1134, %v1147
    %v1149 = vcombine.low %v1141, %v1148
    %vm1150 = vcmp.gt.s32.totalorder %v1044, %v1149
    %v1151 = vsel %vm1150, %v1044, %v1149
    %v1152 = vlaneseq
    %v1153 = vshrl.u32 %v1152, 7
    %v1154 = vsub.s32 0, %v1153
    %v1155 = vrot.slane %v1151, %v1154
    %v1156 = vlaneseq
    %v1157 = vshrl.u32 %v1156, 7
    %v1158 = vsub.s32 1, %v1157
    %v1159 = vrot.slane %v1151, %v1158
    %v1160 = vlaneseq
    %v1161 = vshrl.u32 %v1160, 7
    %v1162 = vsub.s32 2, %v1161
    %v1163 = vrot.slane %v1151, %v1162
    %v1164 = vlaneseq
    %v1165 = vshrl.u32 %v1164, 7
    %v1166 = vsub.s32 3, %v1165
    %v1167 = vrot.slane %v1151, %v1166
    %v1168 = vlaneseq
    %v1169 = vshrl.u32 %v1168, 7
    %v1170 = vsub.s32 4, %v1169
    %v1171 = vrot.slane %v1151, %v1170
    %v1172 = vlaneseq
    %v1173 = vshrl.u32 %v1172, 7
    %v1174 = vsub.s32 5, %v1173
    %v1175 = vrot.slane %v1151, %v1174
    %v1176 = vlaneseq
    %v1177 = vshrl.u32 %v1176, 7
    %v1178 = vsub.s32 6, %v1177
    %v1179 = vrot.slane %v1151, %v1178
    %v1180 = vlaneseq
    %v1181 = vshrl.u32 %v1180, 7
    %v1182 = vsub.s32 7, %v1181
    %v1183 = vrot.slane %v1151, %v1182
    %1184 = vrot.lane.b32.xlu0 %v1155, 8
    %v1185 = vpop.permute.xlu0 %1184
    %1186 = vrot.lane.b32.xlu0 %v1159, 8
    %v1187 = vpop.permute.xlu0 %1186
    %1188 = vrot.lane.b32.xlu0 %v1163, 8
    %v1189 = vpop.permute.xlu0 %1188
    %1190 = vrot.lane.b32.xlu0 %v1167, 8
    %v1191 = vpop.permute.xlu0 %1190
    %1192 = vrot.lane.b32.xlu0 %v1171, 8
    %v1193 = vpop.permute.xlu0 %1192
    %1194 = vrot.lane.b32.xlu0 %v1175, 8
    %v1195 = vpop.permute.xlu0 %1194
    %1196 = vrot.lane.b32.xlu0 %v1179, 8
    %v1197 = vpop.permute.xlu0 %1196
    %1198 = vrot.lane.b32.xlu0 %v1183, 8
    %v1199 = vpop.permute.xlu0 %1198
    %v1200 = vsel %vm452, %v1197, %v1199
    %v1201 = vsel %vm452, %v1195, %v1197
    %v1202 = vsel %vm452, %v1193, %v1195
    %v1203 = vsel %vm452, %v1191, %v1193
    %v1204 = vsel %vm452, %v1189, %v1191
    %v1205 = vsel %vm452, %v1187, %v1189
    %v1206 = vsel %vm452, %v1185, %v1187
    %v1207 = vsel %vm452, %v1199, %v1185
    %v1208 = vcombine.low %v1207, %v1206
    %v1209 = vcombine.low %v1205, %v1204
    %v1210 = vcombine.low %v1203, %v1202
    %v1211 = vcombine.low %v1201, %v1200
    %v1213 = vunpack.c.l.s4 1966171168
    %v1214 = vunpack.c.0.s8 %v1213
    %v1215 = vlaneseq
    %v1216 = vshrl.u32 %v1215, 7
    %v1217 = vsub.s32 %v1214, %v1216
    %v1218 = vrot.slane %v1208, %v1217
    %v1220 = vunpack.c.l.s4 1966171168
    %v1221 = vunpack.c.0.s8 %v1220
    %v1222 = vlaneseq
    %v1223 = vshrl.u32 %v1222, 7
    %v1224 = vsub.s32 %v1221, %v1223
    %v1225 = vrot.slane %v1209, %v1224
    %v1227 = vunpack.c.l.s4 1966171168
    %v1228 = vunpack.c.0.s8 %v1227
    %v1229 = vlaneseq
    %v1230 = vshrl.u32 %v1229, 7
    %v1231 = vsub.s32 %v1228, %v1230
    %v1232 = vrot.slane %v1210, %v1231
    %v1234 = vunpack.c.l.s4 1966171168
    %v1235 = vunpack.c.0.s8 %v1234
    %v1236 = vlaneseq
    %v1237 = vshrl.u32 %v1236, 7
    %v1238 = vsub.s32 %v1235, %v1237
    %v1239 = vrot.slane %v1211, %v1238
    %v1240 = vcombine.low %v1218, %v1225
    %v1241 = vcombine.low %v1232, %v1239
    %v1243 = vunpack.c.l.s4 1966171168
    %v1244 = vunpack.c.0.s8 %v1243
    %v1245 = vlaneseq
    %v1246 = vshrl.u32 %v1245, 7
    %v1247 = vsub.s32 %v1244, %v1246
    %v1248 = vrot.slane %v1240, %v1247
    %v1250 = vunpack.c.l.s4 1966171168
    %v1251 = vunpack.c.0.s8 %v1250
    %v1252 = vlaneseq
    %v1253 = vshrl.u32 %v1252, 7
    %v1254 = vsub.s32 %v1251, %v1253
    %v1255 = vrot.slane %v1241, %v1254
    %v1256 = vcombine.low %v1248, %v1255
    %vm1257 = vcmp.gt.s32.totalorder %v1151, %v1256
    %v1258 = vsel %vm1257, %v1151, %v1256
    %vm1259 = vcmp.eq.s32.totalorder %v935, %v1258
    %v1260 = vmul.f32 %v43, 0.0625
    %v1261 = vmul.f32 %v44, 0.0625
    %v1262 = vsel %vm1259, 1, 0
    %v1263 = vlaneseq
    %v1264 = vshrl.u32 %v1263, 7
    %v1265 = vsub.s32 0, %v1264
    %v1266 = vrot.slane %v1262, %v1265
    %v1267 = vlaneseq
    %v1268 = vshrl.u32 %v1267, 7
    %v1269 = vsub.s32 1, %v1268
    %v1270 = vrot.slane %v1262, %v1269
    %v1271 = vlaneseq
    %v1272 = vshrl.u32 %v1271, 7
    %v1273 = vsub.s32 2, %v1272
    %v1274 = vrot.slane %v1262, %v1273
    %v1275 = vlaneseq
    %v1276 = vshrl.u32 %v1275, 7
    %v1277 = vsub.s32 3, %v1276
    %v1278 = vrot.slane %v1262, %v1277
    %v1279 = vlaneseq
    %v1280 = vshrl.u32 %v1279, 7
    %v1281 = vsub.s32 4, %v1280
    %v1282 = vrot.slane %v1262, %v1281
    %v1283 = vlaneseq
    %v1284 = vshrl.u32 %v1283, 7
    %v1285 = vsub.s32 5, %v1284
    %v1286 = vrot.slane %v1262, %v1285
    %v1287 = vlaneseq
    %v1288 = vshrl.u32 %v1287, 7
    %v1289 = vsub.s32 6, %v1288
    %v1290 = vrot.slane %v1262, %v1289
    %v1291 = vlaneseq
    %v1292 = vshrl.u32 %v1291, 7
    %v1293 = vsub.s32 7, %v1292
    %v1294 = vrot.slane %v1262, %v1293
    %vm1295 = vcmp.eq.s32.totalorder %v1266, 1
    %vm1296 = vcmp.eq.s32.totalorder %v1270, 1
    %vm1297 = vcmp.eq.s32.totalorder %v1274, 1
    %vm1298 = vcmp.eq.s32.totalorder %v1278, 1
    %vm1299 = vcmp.eq.s32.totalorder %v1282, 1
    %vm1300 = vcmp.eq.s32.totalorder %v1286, 1
    %vm1301 = vcmp.eq.s32.totalorder %v1290, 1
    %vm1302 = vcmp.eq.s32.totalorder %v1294, 1
    %v1305 = vcombine.high %v505, %v505
    %v1307 = vunpack.c.l.s4 1983009808
    %v1308 = vunpack.c.0.s8 %v1307
    %v1309 = vlaneseq
    %v1310 = vshrl.u32 %v1309, 7
    %v1311 = vsub.s32 %v1308, %v1310
    %v1312 = vrot.slane %v505, %v1311
    %v1314 = vunpack.c.l.s4 1983009808
    %v1315 = vunpack.c.0.s8 %v1314
    %v1316 = vlaneseq
    %v1317 = vshrl.u32 %v1316, 7
    %v1318 = vsub.s32 %v1315, %v1317
    %v1319 = vrot.slane %v1305, %v1318
    %v1320 = vcombine.high %v1312, %v1312
    %v1321 = vcombine.high %v1319, %v1319
    %v1322 = vcombine.high %v506, %v506
    %v1324 = vunpack.c.l.s4 1983009808
    %v1325 = vunpack.c.0.s8 %v1324
    %v1326 = vlaneseq
    %v1327 = vshrl.u32 %v1326, 7
    %v1328 = vsub.s32 %v1325, %v1327
    %v1329 = vrot.slane %v506, %v1328
    %v1331 = vunpack.c.l.s4 1983009808
    %v1332 = vunpack.c.0.s8 %v1331
    %v1333 = vlaneseq
    %v1334 = vshrl.u32 %v1333, 7
    %v1335 = vsub.s32 %v1332, %v1334
    %v1336 = vrot.slane %v1322, %v1335
    %v1337 = vcombine.high %v1329, %v1329
    %v1338 = vcombine.high %v1336, %v1336
    %v1347 = vsel %vm1295, %v1312, 0.0
    %v1348 = vsel %vm1296, %v1320, 0.0
    %v1349 = vsel %vm1297, %v1319, 0.0
    %v1350 = vsel %vm1298, %v1321, 0.0
    %v1351 = vsel %vm1299, %v1329, 0.0
    %v1352 = vsel %vm1300, %v1337, 0.0
    %v1353 = vsel %vm1301, %v1336, 0.0
    %v1354 = vsel %vm1302, %v1338, 0.0
    %v1363 = vcombine.low %v1347, %v1348
    %v1364 = vcombine.low %v1349, %v1350
    %v1366 = vunpack.c.l.s4 1983009808
    %v1367 = vunpack.c.0.s8 %v1366
    %v1368 = vlaneseq
    %v1369 = vshrl.u32 %v1368, 7
    %v1370 = vsub.s32 %v1367, %v1369
    %v1371 = vrot.slane %v1363, %v1370
    %v1373 = vunpack.c.l.s4 1983009808
    %v1374 = vunpack.c.0.s8 %v1373
    %v1375 = vlaneseq
    %v1376 = vshrl.u32 %v1375, 7
    %v1377 = vsub.s32 %v1374, %v1376
    %v1378 = vrot.slane %v1364, %v1377
    %v1379 = vcombine.low %v1371, %v1378
    %v1380 = vcombine.low %v1351, %v1352
    %v1381 = vcombine.low %v1353, %v1354
    %v1383 = vunpack.c.l.s4 1983009808
    %v1384 = vunpack.c.0.s8 %v1383
    %v1385 = vlaneseq
    %v1386 = vshrl.u32 %v1385, 7
    %v1387 = vsub.s32 %v1384, %v1386
    %v1388 = vrot.slane %v1380, %v1387
    %v1390 = vunpack.c.l.s4 1983009808
    %v1391 = vunpack.c.0.s8 %v1390
    %v1392 = vlaneseq
    %v1393 = vshrl.u32 %v1392, 7
    %v1394 = vsub.s32 %v1391, %v1393
    %v1395 = vrot.slane %v1381, %v1394
    %v1396 = vcombine.low %v1388, %v1395
    %v1399 = vadd.f32 %v1260, %v1379
    %v1400 = vadd.f32 %v1261, %v1396
    %v1401 = vld [vmem:[#allocation5] sm:$0xff]
    %v1403 = vlaneseq
    %v1404 = vshrl.u32 %v1403, 7
    %v1405 = vsub.s32 0, %v1404
    %v1406 = vrot.slane %v1401, %v1405
    %v1407 = vlaneseq
    %v1408 = vshrl.u32 %v1407, 7
    %v1409 = vsub.s32 1, %v1408
    %v1410 = vrot.slane %v1401, %v1409
    %v1411 = vlaneseq
    %v1412 = vshrl.u32 %v1411, 7
    %v1413 = vsub.s32 2, %v1412
    %v1414 = vrot.slane %v1401, %v1413
    %v1415 = vlaneseq
    %v1416 = vshrl.u32 %v1415, 7
    %v1417 = vsub.s32 3, %v1416
    %v1418 = vrot.slane %v1401, %v1417
    %v1419 = vlaneseq
    %v1420 = vshrl.u32 %v1419, 7
    %v1421 = vsub.s32 4, %v1420
    %v1422 = vrot.slane %v1401, %v1421
    %v1423 = vlaneseq
    %v1424 = vshrl.u32 %v1423, 7
    %v1425 = vsub.s32 5, %v1424
    %v1426 = vrot.slane %v1401, %v1425
    %v1427 = vlaneseq
    %v1428 = vshrl.u32 %v1427, 7
    %v1429 = vsub.s32 6, %v1428
    %v1430 = vrot.slane %v1401, %v1429
    %v1431 = vlaneseq
    %v1432 = vshrl.u32 %v1431, 7
    %v1433 = vsub.s32 7, %v1432
    %v1434 = vrot.slane %v1401, %v1433
    %v1435 = vcombine.low %v1406, %v1410
    %v1436 = vcombine.low %v1414, %v1418
    %v1438 = vunpack.c.l.s4 1983009808
    %v1439 = vunpack.c.0.s8 %v1438
    %v1440 = vlaneseq
    %v1441 = vshrl.u32 %v1440, 7
    %v1442 = vsub.s32 %v1439, %v1441
    %v1443 = vrot.slane %v1435, %v1442
    %v1445 = vunpack.c.l.s4 1983009808
    %v1446 = vunpack.c.0.s8 %v1445
    %v1447 = vlaneseq
    %v1448 = vshrl.u32 %v1447, 7
    %v1449 = vsub.s32 %v1446, %v1448
    %v1450 = vrot.slane %v1436, %v1449
    %v1451 = vcombine.low %v1443, %v1450
    %v1452 = vcombine.low %v1422, %v1426
    %v1453 = vcombine.low %v1430, %v1434
    %v1455 = vunpack.c.l.s4 1983009808
    %v1456 = vunpack.c.0.s8 %v1455
    %v1457 = vlaneseq
    %v1458 = vshrl.u32 %v1457, 7
    %v1459 = vsub.s32 %v1456, %v1458
    %v1460 = vrot.slane %v1452, %v1459
    %v1462 = vunpack.c.l.s4 1983009808
    %v1463 = vunpack.c.0.s8 %v1462
    %v1464 = vlaneseq
    %v1465 = vshrl.u32 %v1464, 7
    %v1466 = vsub.s32 %v1463, %v1465
    %v1467 = vrot.slane %v1453, %v1466
    %v1468 = vcombine.low %v1460, %v1467
    %v1471 = vmul.f32 %v1399, %v1451
    %v1472 = vmul.f32 %v1400, %v1468
    %v1475 = vcombine.high %v1471, %v1471
    %v1477 = vunpack.c.l.s4 1983009808
    %v1478 = vunpack.c.0.s8 %v1477
    %v1479 = vlaneseq
    %v1480 = vshrl.u32 %v1479, 7
    %v1481 = vsub.s32 %v1478, %v1480
    %v1482 = vrot.slane %v1471, %v1481
    %v1484 = vunpack.c.l.s4 1983009808
    %v1485 = vunpack.c.0.s8 %v1484
    %v1486 = vlaneseq
    %v1487 = vshrl.u32 %v1486, 7
    %v1488 = vsub.s32 %v1485, %v1487
    %v1489 = vrot.slane %v1475, %v1488
    %v1490 = vcombine.high %v1482, %v1482
    %v1491 = vcombine.high %v1489, %v1489
    %v1492 = vcombine.high %v1472, %v1472
    %v1494 = vunpack.c.l.s4 1983009808
    %v1495 = vunpack.c.0.s8 %v1494
    %v1496 = vlaneseq
    %v1497 = vshrl.u32 %v1496, 7
    %v1498 = vsub.s32 %v1495, %v1497
    %v1499 = vrot.slane %v1472, %v1498
    %v1501 = vunpack.c.l.s4 1983009808
    %v1502 = vunpack.c.0.s8 %v1501
    %v1503 = vlaneseq
    %v1504 = vshrl.u32 %v1503, 7
    %v1505 = vsub.s32 %v1502, %v1504
    %v1506 = vrot.slane %v1492, %v1505
    %v1507 = vcombine.high %v1499, %v1499
    %v1508 = vcombine.high %v1506, %v1506
    %vm1517 = vcmask 1041408
    %v1518 = vsel %vm1517, %v1482, 0.0
    %v1519 = vsel %vm1517, %v1490, 0.0
    %v1520 = vadd.f32 %v1518, %v1519
    %v1521 = vsel %vm1517, %v1489, 0.0
    %v1522 = vadd.f32 %v1520, %v1521
    %v1523 = vsel %vm1517, %v1491, 0.0
    %v1524 = vadd.f32 %v1522, %v1523
    %v1525 = vsel %vm1517, %v1499, 0.0
    %v1526 = vadd.f32 %v1524, %v1525
    %v1527 = vsel %vm1517, %v1507, 0.0
    %v1528 = vadd.f32 %v1526, %v1527
    %v1529 = vsel %vm1517, %v1506, 0.0
    %v1530 = vadd.f32 %v1528, %v1529
    %v1531 = vsel %vm1517, %v1508, 0.0
    %v1532 = vadd.f32 %v1530, %v1531
    %1533 = vadd.xlane.f32.xlu0 %v1532
    %v1534 = vpop.xlane.xlu0 %1533
    %v1535 = vld [vmem:[#allocation2] sm:$0x1]
    %v1537 = vlaneseq
    %v1538 = vshrl.u32 %v1537, 7
    %v1539 = vsub.s32 0, %v1538
    %v1540 = vrot.slane %v1535, %v1539
    %v1542 = vadd.f32 %v1534, %v1540
    %v1543 = vxor.u32 %v1542, 2147483648
    %v1544 = vmul.f32 %v1543, 1.442695
    %v1545 = vpow.pop %v1544
    %v1546 = vadd.f32 %v1545, 1.0
    %v1547 = vrcp.pop %v1546
    %v1548 = vmul.f32 1.0, %v1547
    %vm1549 = vcmask 1024
    %1550 = vst.msk [vmem:[%s4] sm:$0x3] %vm1549, %v1548
    // Predicated region
    $region26: #{tpu_custom_call.1} parent=1 // pred_check
      _
    $region27: #{tpu_custom_call.1} parent=1 // pred_check_branch
      %1552 = sbr.rel (0) target = $region29
    $region28: #{tpu_custom_call.1} parent=1 // pred_region
      _
    $region29: #{tpu_custom_call.1} parent=1 // pred_fallthru
      _
    // Predicated region
    $region30: #{tpu_custom_call.1} parent=1 // pred_check
      _
    $region31: #{tpu_custom_call.1} parent=1 // pred_check_branch
      %1554 = sbr.rel (0) target = $region33
    $region32: #{tpu_custom_call.1} parent=1 // pred_region
      _
    $region33: #{tpu_custom_call.1} parent=1 // pred_fallthru
      _
    %1555 = vsyncpa [#allocation4], 1
    %1556 = vsyncpa [#allocation6], 1

</llo_original>
